<compile_context>
chip_gen: v5e
topology: v5e:2x2
jax: 0.10.0
libtpu: 0.0.40
codegen_flags: <defaults>
</compile_context>

<pallas_src>
import math
import jax
import jax.numpy as jnp
from jax.experimental import pallas as pl
from jax.experimental.pallas import tpu as pltpu


def attention_kernel(event_ref, w_ref, out_ref):
    # event_ref: (TB, N, D) ; w_ref: (D, 2D) = [cp^T | ap^T] ; out_ref: (TB, D)
    ev = event_ref[...]                                  # (TB, N, D)
    target = ev[:, 0, :]                                 # (TB, D)
    context = ev[:, 1:, :]                               # (TB, N-1, D)
    D = target.shape[-1]

    # One fused MXU matmul: columns [:D] = target @ cp^T, [D:] = target @ ap^T.
    proj = jnp.dot(target, w_ref[...], preferred_element_type=jnp.float32)  # (TB, 2D)
    v_cp = proj[:, :D]                                   # (TB, D)
    v_ap = proj[:, D:]                                   # (TB, D)

    # score[b, 0]   = <context[b, 0], v_cp[b]>   (conf row -> cp_bilinear)
    # score[b, j>0] = <context[b, j], v_ap[b]>   (author rows -> ap_bilinear)
    s_cp = jnp.sum(context * v_cp[:, None, :], axis=-1)  # (TB, N-1)
    s_ap = jnp.sum(context * v_ap[:, None, :], axis=-1)  # (TB, N-1)
    col = jax.lax.broadcasted_iota(jnp.int32, s_cp.shape, 1)
    scores = jnp.where(col == 0, s_cp, s_ap)             # (TB, N-1)

    # LeakyReLU (PyTorch default negative_slope = 0.01).
    scores = jnp.where(scores > 0, scores, 0.01 * scores)

    # Softmax over the context axis (lanes of the (TB, N-1) block).
    m = jnp.max(scores, axis=-1, keepdims=True)          # (TB, 1)
    e = jnp.exp(scores - m)
    denom = jnp.sum(e, axis=-1, keepdims=True)           # (TB, 1)
    att = e * pl.reciprocal(denom, approx=True)          # (TB, N-1)

    # Attention-weighted aggregation of the context -> dense (TB, D) store.
    ctx_agg = jnp.sum(att[:, :, None] * context, axis=1)  # (TB, D)
    out_ref[...] = ctx_agg.astype(out_ref.dtype)


def attention_forward(event, cp_bilinear, ap_bilinear, block_b=512):
    """Returns (B, 2*D): [attention-aggregated context | target]."""
    B, N, D = event.shape

    # Fuse the (transposed) bilinear weights into one (D, 2D) operand so the
    # kernel issues a single matmul and a single weight DMA per block.
    w = jnp.concatenate([cp_bilinear.T, ap_bilinear.T], axis=1)   # (D, 2D)

    if B <= block_b:
        # Small batch: a single full-size block (block shape == array shape is
        # always layout-legal). On v7x with larger B, multiple grid steps keep
        # both TensorCores busy.
        TB, Bp = B, B
        event_p = event
    else:
        TB = block_b                       # multiple of 8 -> sublane aligned
        Bp = pl.cdiv(B, TB) * TB
        event_p = jnp.pad(event, ((0, Bp - B), (0, 0), (0, 0)))

    ctx_agg = pl.pallas_call(
        attention_kernel,
        out_shape=jax.ShapeDtypeStruct((Bp, D), event.dtype),
        grid_spec=pltpu.PrefetchScalarGridSpec(
            num_scalar_prefetch=0,
            grid=(Bp // TB,),
            in_specs=[
                pl.BlockSpec((TB, N, D), lambda b: (b, 0, 0)),
                pl.BlockSpec((D, 2 * D), lambda b: (0, 0)),
            ],
            out_specs=pl.BlockSpec((TB, D), lambda b: (b, 0)),
        ),
        compiler_params=pltpu.CompilerParams(
            dimension_semantics=("parallel",)),
    )(event_p, w)

    # Concat with the target outside the kernel: the target is already in HBM,
    # so the kernel never re-writes it and avoids an in-kernel lane concat.
    return jnp.concatenate([ctx_agg[:B], event[:, 0, :]], axis=1)


def attention_reference(event, cp_bilinear, ap_bilinear):
    """Pure-JAX reference mirroring the PyTorch forward (for verification)."""
    target = event[:, 0:1, :]                          # (B, 1, D)
    context = event[:, 1:, :]                          # (B, N-1, D)
    conf = context[:, 0:1, :]                          # (B, 1, D)
    author = context[:, 1:, :]                         # (B, N-2, D)
    conf_coef = jnp.einsum('bij,jk,bkl->bil', conf, cp_bilinear,
                           jnp.swapaxes(target, 1, 2))
    author_coef = jnp.einsum('bij,jk,bkl->bil', author, ap_bilinear,
                             jnp.swapaxes(target, 1, 2))
    coef = jnp.concatenate([conf_coef, author_coef], axis=1)[..., 0]   # (B, N-1)
    att = jnp.where(coef > 0, coef, 0.01 * coef)
    att = jax.nn.softmax(att, axis=1)[..., None]
    context_aggre = jnp.sum(att * context, axis=1)
    return jnp.concatenate([context_aggre, event[:, 0, :]], axis=1)


if __name__ == "__main__":
    B, N, D = 2, 5, 32   # batch=2, 1 target + 1 conf + 3 authors, out_dim=32
    key = jax.random.PRNGKey(0)
    k_ev, k_cp, k_ap, k_ev2 = jax.random.split(key, 4)

    event = jax.random.normal(k_ev, (B, N, D), dtype=jnp.float32)

    # xavier_normal_(gain=1.414): std = gain * sqrt(2 / (fan_in + fan_out))
    std = 1.414 * math.sqrt(2.0 / (D + D))
    cp_bilinear = std * jax.random.normal(k_cp, (D, D), dtype=jnp.float32)
    ap_bilinear = std * jax.random.normal(k_ap, (D, D), dtype=jnp.float32)

    # Tolerance is set to cover the EUP approximate reciprocal used for the
    # softmax normalization (per the performance review); structural errors
    # (wrong weight selection / softmax axis / slope) would be O(0.1-1).
    TOL = dict(atol=5e-3, rtol=5e-3)

    out = attention_forward(event, cp_bilinear, ap_bilinear)
    out = jax.block_until_ready(out)
    ref = attention_reference(event, cp_bilinear, ap_bilinear)
    assert out.shape == (B, 2 * D), out.shape
    assert jnp.allclose(out, ref, **TOL), "mismatch vs reference (single block)"

    # Exercise the multi-block (tiled + padded batch) path with a small TB.
    B2 = 37
    event2 = jax.random.normal(k_ev2, (B2, N, D), dtype=jnp.float32)
    out2 = attention_forward(event2, cp_bilinear, ap_bilinear, block_b=8)
    out2 = jax.block_until_ready(out2)
    ref2 = attention_reference(event2, cp_bilinear, ap_bilinear)
    assert out2.shape == (B2, 2 * D), out2.shape
    assert jnp.allclose(out2, ref2, **TOL), "mismatch vs reference (tiled)"

    print("KERNEL_OK")
</pallas_src>

<mosaic_0001>
module attributes {stable_mosaic.version = 11 : i64} {
  func.func @attention_kernel(%arg0: i32, %arg1: memref<2x5x32xf32, #tpu.memory_space<vmem>>, %arg2: memref<32x64xf32, #tpu.memory_space<vmem>>, %arg3: memref<2x32xf32, #tpu.memory_space<vmem>>) attributes {dimension_semantics = [#tpu.dimension_semantics<parallel>], iteration_bounds = array<i64: 1>, scalar_prefetch = 0 : i64, scratch_operands = 0 : i64, tpu.core_type = #tpu.core_type<tc>, window_params = [{transform_indices = @transform_0, window_bounds = array<i64: 2, 5, 32>}, {pipeline_mode = #tpu.pipeline_mode<synchronous>, transform_indices = @transform_1, window_bounds = array<i64: 32, 64>}, {transform_indices = @transform_2, window_bounds = array<i64: 2, 32>}]} {
    %c0 = arith.constant 0 : index
    %c0_0 = arith.constant 0 : index
    %c0_1 = arith.constant 0 : index
    %0 = vector.load %arg1[%c0, %c0_0, %c0_1] : memref<2x5x32xf32, #tpu.memory_space<vmem>>, vector<2x5x32xf32>
    %1 = vector.extract_strided_slice %0 {offsets = [0, 0, 0], sizes = [2, 1, 32], strides = [1, 1, 1]} : vector<2x5x32xf32> to vector<2x1x32xf32>
    %2 = vector.shape_cast %1 : vector<2x1x32xf32> to vector<2x32xf32>
    %3 = vector.extract_strided_slice %0 {offsets = [0, 1, 0], sizes = [2, 4, 32], strides = [1, 1, 1]} : vector<2x5x32xf32> to vector<2x4x32xf32>
    %c0_2 = arith.constant 0 : index
    %c0_3 = arith.constant 0 : index
    %4 = vector.load %arg2[%c0_2, %c0_3] : memref<32x64xf32, #tpu.memory_space<vmem>>, vector<32x64xf32>
    %cst = arith.constant dense<0.000000e+00> : vector<2x64xf32>
    %5 = tpu.matmul %2, %4, %cst {dimension_numbers = #tpu.dot_dimension_numbers<[1], [0], [0], [1], [0, 0, 1, 1], [], []>} : vector<2x32xf32>, vector<32x64xf32>, vector<2x64xf32> -> vector<2x64xf32>
    %6 = vector.extract_strided_slice %5 {offsets = [0, 0], sizes = [2, 32], strides = [1, 1]} : vector<2x64xf32> to vector<2x32xf32>
    %7 = vector.extract_strided_slice %5 {offsets = [0, 32], sizes = [2, 32], strides = [1, 1]} : vector<2x64xf32> to vector<2x32xf32>
    %8 = vector.shape_cast %6 : vector<2x32xf32> to vector<2x1x32xf32>
    %9 = vector.broadcast %8 : vector<2x1x32xf32> to vector<2x4x32xf32>
    %10 = arith.mulf %3, %9 : vector<2x4x32xf32>
    %cst_4 = arith.constant dense<0.000000e+00> : vector<2x4xf32>
    %11 = vector.multi_reduction <add>, %10, %cst_4 [2] : vector<2x4x32xf32> to vector<2x4xf32>
    %12 = vector.shape_cast %7 : vector<2x32xf32> to vector<2x1x32xf32>
    %13 = vector.broadcast %12 : vector<2x1x32xf32> to vector<2x4x32xf32>
    %14 = arith.mulf %3, %13 : vector<2x4x32xf32>
    %cst_5 = arith.constant dense<0.000000e+00> : vector<2x4xf32>
    %15 = vector.multi_reduction <add>, %14, %cst_5 [2] : vector<2x4x32xf32> to vector<2x4xf32>
    %16 = tpu.iota {dimensions = array<i32: 1>} : vector<2x4xi32>
    %c0_i32 = arith.constant 0 : i32
    %17 = vector.broadcast %c0_i32 : i32 to vector<2x4xi32>
    %18 = arith.cmpi eq, %16, %17 : vector<2x4xi32>
    %19 = arith.select %18, %11, %15 : vector<2x4xi1>, vector<2x4xf32>
    %cst_6 = arith.constant 0.000000e+00 : f32
    %20 = vector.broadcast %cst_6 : f32 to vector<2x4xf32>
    %21 = arith.cmpf ogt, %19, %20 : vector<2x4xf32>
    %cst_7 = arith.constant 0.00999999977 : f32
    %22 = vector.broadcast %cst_7 : f32 to vector<2x4xf32>
    %23 = arith.mulf %22, %19 : vector<2x4xf32>
    %24 = arith.select %21, %19, %23 : vector<2x4xi1>, vector<2x4xf32>
    %cst_8 = arith.constant dense<0xFF800000> : vector<2xf32>
    %25 = vector.multi_reduction <maximumf>, %24, %cst_8 [1] : vector<2x4xf32> to vector<2xf32>
    %26 = vector.shape_cast %25 : vector<2xf32> to vector<2x1xf32>
    %27 = vector.broadcast %26 : vector<2x1xf32> to vector<2x4xf32>
    %28 = arith.subf %24, %27 : vector<2x4xf32>
    %29 = math.exp %28 : vector<2x4xf32>
    %cst_9 = arith.constant dense<0.000000e+00> : vector<2xf32>
    %30 = vector.multi_reduction <add>, %29, %cst_9 [1] : vector<2x4xf32> to vector<2xf32>
    %31 = vector.shape_cast %30 : vector<2xf32> to vector<2x1xf32>
    %32 = tpu.reciprocal %31 {approx = true} : vector<2x1xf32> -> vector<2x1xf32>
    %33 = vector.broadcast %32 : vector<2x1xf32> to vector<2x4xf32>
    %34 = arith.mulf %29, %33 : vector<2x4xf32>
    %35 = vector.shape_cast %34 : vector<2x4xf32> to vector<2x4x1xf32>
    %36 = vector.broadcast %35 : vector<2x4x1xf32> to vector<2x4x32xf32>
    %37 = arith.mulf %36, %3 : vector<2x4x32xf32>
    %cst_10 = arith.constant dense<0.000000e+00> : vector<2x32xf32>
    %38 = vector.multi_reduction <add>, %37, %cst_10 [1] : vector<2x4x32xf32> to vector<2x32xf32>
    %c0_11 = arith.constant 0 : index
    %c0_12 = arith.constant 0 : index
    %39 = vector.load %arg3[%c0_11, %c0_12] : memref<2x32xf32, #tpu.memory_space<vmem>>, vector<2x32xf32>
    tpu.vector_store %arg3[%c0_11, %c0_12], %38 {strides = array<i32>} : memref<2x32xf32, #tpu.memory_space<vmem>>, vector<2x32xf32>,
    return
  }
  func.func @transform_0(%arg0: i32) -> (i32, i32, i32) {
    %c0_i32 = arith.constant 0 : i32
    %c0_i32_0 = arith.constant 0 : i32
    %c0_i32_1 = arith.constant 0 : i32
    return %arg0, %c0_i32, %c0_i32_0 : i32, i32, i32
  }
  func.func @transform_1(%arg0: i32) -> (i32, i32) {
    %c0_i32 = arith.constant 0 : i32
    %c0_i32_0 = arith.constant 0 : i32
    %c0_i32_1 = arith.constant 0 : i32
    return %c0_i32, %c0_i32_0 : i32, i32
  }
  func.func @transform_2(%arg0: i32) -> (i32, i32) {
    %c0_i32 = arith.constant 0 : i32
    %c0_i32_0 = arith.constant 0 : i32
    return %arg0, %c0_i32 : i32, i32
  }
}

</mosaic_0001>

<llo_original>
// kernel: tpu_custom_call.1
$region0: #{tpu_custom_call.1}
  #allocation0 [shape = 'u32[]', space=smem, size = 0x4, offset = 0x4, fixed_abs, tag = 'smem constant byte address 0x4 - core index']
  #allocation1 [shape = 'u32[72,128]{1,0:T(1,128)}', space=vmem, size = 0x9000, scoped, tag = 'internal scratch']
  %s0 = inlined_call_operand.vmem [shape: f32[2,5,32], index: 0, kind: input, shape index: {}]
  %s1 = inlined_call_operand.hbm [shape: f32[32,64], index: 1, kind: input, shape index: {}]
  %s2 = inlined_call_operand.hbm [shape: f32[2,32], index: 2, kind: output, shape index: {}]
  %s3 = sld [smem:[#allocation0]]
  $region22: #{tpu_custom_call.1} parent=0
    _
  %s5 = ssub.s32 1, %s3
  %s6 = scalar_select 0, %s5, %s3
  $region1: #{tpu_custom_call.1} parent=0
    #allocation2 [shape = 'u8[16384]{0}', space=vmem, size = 0x4000, scoped, tag = 'input window, operand 1, single buffered']
    #allocation3 [shape = 's32[1]{0}', space=sflag, size = 0x4, scoped, tag = 'scoped memory for tpu_custom_call.1']
    #allocation4 [shape = 's32[1]{0}', space=sflag, size = 0x4, scoped, tag = 'scoped memory for tpu_custom_call.1']
    #allocation5 [shape = 'u8[1024]{0}', space=vmem, size = 0x400, scoped, tag = 'output window, operand 0, single buffered']
    %7 = vsyncpa [#allocation3], 0
    %8 = vsyncpa [#allocation4], 0
    // Predicated region
    $region2: #{tpu_custom_call.1} parent=1 // pred_check
      _
    $region3: #{tpu_custom_call.1} parent=1 // pred_check_branch
      %10 = sbr.rel (0) target = $region5
    $region4: #{tpu_custom_call.1} parent=1 // pred_region
      _
    $region5: #{tpu_custom_call.1} parent=1 // pred_fallthru
      _
    // Predicated region
    $region6: #{tpu_custom_call.1} parent=1 // pred_check
      _
    $region7: #{tpu_custom_call.1} parent=1 // pred_check_branch
      %12 = sbr.rel (0) target = $region9
    $region8: #{tpu_custom_call.1} parent=1 // pred_region
      %14 = vsyncadd [#allocation3], 0
      %s15 = sshll.u32 %s1, 4
      %s16 = int_to_ptr.hbm [resolvable:$true] %s15
      %s17 = sshll.u32 [#allocation2], 4
      %s18 = int_to_ptr.vmem [resolvable:$true] %s17
      %23 = dma.hbm_to_vmem [thread:$0]  %s16, 512, %s18, [#allocation3], 128, 128, 8
    $region9: #{tpu_custom_call.1} parent=1 // pred_fallthru
      _
    // Predicated region
    $region10: #{tpu_custom_call.1} parent=1 // pred_check
      _
    $region11: #{tpu_custom_call.1} parent=1 // pred_check_branch
      %25 = sbr.rel (0) target = $region13
    $region12: #{tpu_custom_call.1} parent=1 // pred_region
      %27 = dma.done [#allocation3], 512
    $region13: #{tpu_custom_call.1} parent=1 // pred_fallthru
      _
    %v28 = vld [vmem:[%s0] sm:$0x1f]
    %v29 = vld [vmem:[%s0 + $0x8] sm:$0x1f]
    %v30 = vld [vmem:[#allocation2] sm:$0xff]
    %v31 = vld [vmem:[#allocation2 + $0x8] sm:$0xff]
    %v32 = vld [vmem:[#allocation2 + $0x10] sm:$0xff]
    %v33 = vld [vmem:[#allocation2 + $0x18] sm:$0xff]
    %v36 = vrot.slane %v29, 7
    %vm37 = vcmask 1041409
    %v38 = vsel %vm37, %v36, %v28
    %vm39 = vcmask 261120
    %v40 = vsel %vm39, %v38, 0
    %42 = vmatpush.msra.mxu0 0.0
    %43 = vmatpush.msra.mxu0 0.0
    %44 = vmatpush.msra.mxu0 0.0
    %45 = vmatpush.msra.mxu0 0.0
    %46 = vmatpush.msra.mxu0 0.0
    %47 = vmatpush.msra.mxu0 0.0
    %48 = vmatpush.msra.mxu0 0.0
    %49 = vmatpush.msra.mxu0 0.0
    %50 = vmatpush.msra.mxu0 0.0
    %51 = vmatpush.msra.mxu0 0.0
    %52 = vmatpush.msra.mxu0 0.0
    %53 = vmatpush.msra.mxu0 0.0
    %54 = vmatpush.msra.mxu0 %v33
    %55 = vmatpush.msra.mxu0 %v32
    %56 = vmatpush.msra.mxu0 %v31
    %57 = vmatpush.msra.mxu0 %v30
    %58 = vmatmul.f32.gmra.mxu0 %v40
    %v59 = vpop.f32.mrf.mxu0
    %v60 = vadd.f32 0.0, %v59
    %61 = vdwg.mxu0
    %v63 = vrot.slane %v60, 1
    %v64 = vperm.slane %v60, 0
    %v65 = vperm.slane %v63, 0
    %v68 = vmul.f32 %v28, %v64
    %v69 = vmul.f32 %v29, %v65
    %vm70 = vcmask 258049
    %v71 = vsel %vm70, %v68, 0.0
    %72 = vadd.xlane.f32.xlu0 %v71
    %v73 = vpop.xlane.xlu0 %72
    %v74 = vsel %vm70, %v69, 0.0
    %75 = vadd.xlane.f32.xlu0 %v74
    %v76 = vpop.xlane.xlu0 %75
    %77 = vrot.lane.b32.xlu0 %v64, 96
    %v78 = vpop.permute.xlu0 %77
    %79 = vrot.lane.b32.xlu0 %v65, 96
    %v80 = vpop.permute.xlu0 %79
    %v83 = vmul.f32 %v28, %v78
    %v84 = vmul.f32 %v29, %v80
    %v85 = vsel %vm70, %v83, 0.0
    %86 = vadd.xlane.f32.xlu0 %v85
    %v87 = vpop.xlane.xlu0 %86
    %v88 = vsel %vm70, %v84, 0.0
    %89 = vadd.xlane.f32.xlu0 %v88
    %v90 = vpop.xlane.xlu0 %89
    %v91 = vlaneseq
    %v92 = vand.u32 %v91, 127
    %vm93 = vcmp.eq.s32.totalorder %v92, 0
    %v96 = vadd.s32 %v92, 1
    %v97 = vperm.slane %v73, %v96
    %v98 = vperm.slane %v76, %v96
    %v99 = vsel %vm37, %v98, %v97
    %v103 = vperm.slane %v87, %v96
    %v104 = vperm.slane %v90, %v96
    %v105 = vsel %vm37, %v104, %v103
    %v107 = vsel %vm93, %v99, %v105
    %vm108 = vcmp.gt.f32.partialorder %v107, 0.0
    %v109 = vmul.f32 %v107, 0.01
    %v110 = vsel %vm108, %v107, %v109
    %vm111 = vcmask 25600
    %v112 = vsel %vm111, %v110, -inf
    %113 = vmax.xlane.f32.xlu0 %v112
    %v114 = vpop.xlane.xlu0 %113
    %v115 = vsub.f32 %v110, %v114
    %v116 = vmul.f32 %v115, 1.442695
    %v117 = vpow.pop %v116
    %v118 = vsel %vm111, %v117, 0.0
    %119 = vadd.xlane.f32.xlu0 %v118
    %v120 = vpop.xlane.xlu0 %119
    %v121 = vrcp.pop %v120
    %v122 = vmul.f32 %v117, %v121
    %v123 = vperm.slane %v122, 0
    %v124 = vlaneseq
    %v125 = vshrl.u32 %v124, 7
    %127 = vset.pattern.permute.xlu0 %v125
    %128 = vperm.xlu0 %127, %v123
    %v129 = vpop.permute.xlu0 %128
    %v130 = vperm.slane %v122, 1
    %v131 = vlaneseq
    %v132 = vshrl.u32 %v131, 7
    %134 = vset.pattern.permute.xlu0 %v132
    %135 = vperm.xlu0 %134, %v130
    %v136 = vpop.permute.xlu0 %135
    %v137 = vrot.slane %v28, 1
    %v138 = vrot.slane %v29, 1
    %v141 = vmul.f32 %v129, %v137
    %v142 = vmul.f32 %v136, %v138
    %vm143 = vcmask 257024
    %v144 = vsel %vm143, %v141, 0.0
    %v145 = vrot.slane %v144, 4
    %v146 = vadd.f32 %v144, %v145
    %v147 = vrot.slane %v146, 2
    %v148 = vadd.f32 %v146, %v147
    %v149 = vrot.slane %v148, 1
    %v150 = vadd.f32 %v148, %v149
    %v151 = vsel %vm143, %v142, 0.0
    %v152 = vrot.slane %v151, 4
    %v153 = vadd.f32 %v151, %v152
    %v154 = vrot.slane %v153, 2
    %v155 = vadd.f32 %v153, %v154
    %v156 = vrot.slane %v155, 1
    %v157 = vadd.f32 %v155, %v156
    %v160 = vsel %vm37, %v157, %v150
    %vm162 = vcmask 254976
    %163 = vst.msk [vmem:[#allocation5] sm:$0x3] %vm162, %v160
    // Predicated region
    $region14: #{tpu_custom_call.1} parent=1 // pred_check
      _
    $region15: #{tpu_custom_call.1} parent=1 // pred_check_branch
      %165 = sbr.rel (0) target = $region17
    $region16: #{tpu_custom_call.1} parent=1 // pred_region
      %167 = vsyncadd [#allocation4], 0
      %s169 = sshll.u32 [#allocation5], 4
      %s170 = int_to_ptr.vmem [resolvable:$true] %s169
      %s171 = sshll.u32 %s2, 4
      %s172 = int_to_ptr.hbm [resolvable:$true] %s171
      %174 = dma.vmem_to_hbm [thread:$0]  %s170, 32, %s172, [#allocation4]
    $region17: #{tpu_custom_call.1} parent=1 // pred_fallthru
      _
    // Predicated region
    $region18: #{tpu_custom_call.1} parent=1 // pred_check
      _
    $region19: #{tpu_custom_call.1} parent=1 // pred_check_branch
      %176 = sbr.rel (0) target = $region21
    $region20: #{tpu_custom_call.1} parent=1 // pred_region
      %178 = dma.done [#allocation4], 32
    $region21: #{tpu_custom_call.1} parent=1 // pred_fallthru
      _
    %179 = vsyncpa [#allocation3], 1
    %180 = vsyncpa [#allocation4], 1

</llo_original>
